<compile_context>
chip_gen: v7x
topology: tpu7x:2x2x1
jax: 0.10.0
libtpu: 0.0.40
codegen_flags: <defaults>
</compile_context>

<pallas_src>
import jax
import jax.numpy as jnp
from jax import lax
from jax.experimental import pallas as pl
from jax.experimental.pallas import tpu as pltpu


def _matmul_bias_prelu_kernel(p_ref, w_ref, b_ref, a_ref, o_ref):
    # p_ref: (tile_m, Kdim)  im2col patches (compute dtype)
    # w_ref: (Kdim,  Cp)     reshaped conv weight (compute dtype), Cp % 128 == 0
    # b_ref: (1, Cp) f32     conv bias (zero-padded to Cp)
    # a_ref: (1, Cp) f32     PReLU per-channel slope (zero-padded to Cp)
    # o_ref: (tile_m, Cp)    lane-dense output tile
    y = jnp.dot(p_ref[...], w_ref[...], preferred_element_type=jnp.float32)
    y = y + b_ref[...]                              # broadcast (1, Cp)
    y = jnp.where(y > 0, y, a_ref[...] * y)         # per-channel PReLU, f32
    o_ref[...] = y.astype(o_ref.dtype)


def conv_prelu(x_nchw, weight_oihw, bias, alpha, *, stride=1, padding=0,
               dilation=1, groups=1, tile_m=256,
               compute_dtype=jnp.bfloat16):
    """Conv2d(stride, padding) + PReLU(per-channel), NCHW in / NCHW out."""
    assert dilation == 1 and groups == 1, "only dilation=1, groups=1 supported"
    N, Cin, H, W = x_nchw.shape
    Cout, Cin_w, KH, KW = weight_oihw.shape
    assert Cin_w == Cin
    out_dtype = x_nchw.dtype

    # ---------------- wrapper glue: layout + im2col (no MACs) ----------------
    x = jnp.transpose(x_nchw, (0, 2, 3, 1))                       # NHWC
    x = jnp.pad(x, ((0, 0), (padding, padding), (padding, padding), (0, 0)))
    Hp, Wp = H + 2 * padding, W + 2 * padding
    Ho = (Hp - KH) // stride + 1
    Wo = (Wp - KW) // stride + 1

    # Patch slab: taps concatenated kh-major, then kw, then cin — matching the
    # row order of w_hwio.reshape(KH*KW*Cin, Cout) below.
    taps = []
    for kh in range(KH):
        for kw in range(KW):
            taps.append(lax.slice(
                x,
                (0, kh, kw, 0),
                (N, kh + (Ho - 1) * stride + 1, kw + (Wo - 1) * stride + 1, Cin),
                (1, stride, stride, 1)))
    Kdim = KH * KW * Cin
    M = N * Ho * Wo
    patches = jnp.concatenate(taps, axis=-1).reshape(M, Kdim)
    patches = patches.astype(compute_dtype)

    # Pad M to the tile size and Cout to a lane-dense multiple of 128.
    Mp = pl.cdiv(M, tile_m) * tile_m
    Cp = pl.cdiv(Cout, 128) * 128
    patches = jnp.pad(patches, ((0, Mp - M), (0, 0)))

    w = jnp.transpose(weight_oihw, (2, 3, 1, 0)).reshape(Kdim, Cout)
    w = jnp.pad(w, ((0, 0), (0, Cp - Cout))).astype(compute_dtype)
    b2 = jnp.pad(bias.astype(jnp.float32), (0, Cp - Cout)).reshape(1, Cp)
    a2 = jnp.pad(alpha.astype(jnp.float32), (0, Cp - Cout)).reshape(1, Cp)

    # ----------------------------- pallas_call -------------------------------
    itemsize_c = jnp.dtype(compute_dtype).itemsize
    itemsize_o = jnp.dtype(out_dtype).itemsize
    cost = pl.CostEstimate(
        flops=2 * N * Ho * Wo * KH * KW * Cin * Cout,
        transcendentals=0,
        bytes_accessed=(Mp * Kdim * itemsize_c + Kdim * Cp * itemsize_c
                        + 2 * Cp * 4 + Mp * Cp * itemsize_o))

    out_flat = pl.pallas_call(
        _matmul_bias_prelu_kernel,
        out_shape=jax.ShapeDtypeStruct((Mp, Cp), out_dtype),
        grid_spec=pltpu.PrefetchScalarGridSpec(
            num_scalar_prefetch=0,
            grid=(Mp // tile_m,),
            in_specs=[
                pl.BlockSpec((tile_m, Kdim), lambda i: (i, 0)),
                # Weight / bias / alpha stay resident (constant index maps).
                # (pl.Buffered(1) would halve their VMEM footprint for large
                #  Cout; unnecessary at these toy sizes.)
                pl.BlockSpec((Kdim, Cp), lambda i: (0, 0)),
                pl.BlockSpec((1, Cp), lambda i: (0, 0)),
                pl.BlockSpec((1, Cp), lambda i: (0, 0)),
            ],
            out_specs=pl.BlockSpec((tile_m, Cp), lambda i: (i, 0)),
        ),
        compiler_params=pltpu.CompilerParams(
            dimension_semantics=("parallel",)),
        cost_estimate=cost,
    )(patches, w, b2, a2)

    out = out_flat[:M, :Cout].reshape(N, Ho, Wo, Cout)
    return jnp.transpose(out, (0, 3, 1, 2))                       # back to NCHW


def _reference(x_nchw, weight_oihw, bias, alpha, *, stride, padding,
               compute_dtype=jnp.float32):
    y = lax.conv_general_dilated(
        x_nchw.astype(compute_dtype), weight_oihw.astype(compute_dtype),
        window_strides=(stride, stride),
        padding=((padding, padding), (padding, padding)),
        dimension_numbers=("NCHW", "OIHW", "NCHW"),
        preferred_element_type=jnp.float32,
    )
    y = y + bias[None, :, None, None]
    y = jnp.where(y > 0, y, alpha[None, :, None, None] * y)
    return y.astype(x_nchw.dtype)


if __name__ == "__main__":
    # ConvPRelu(in_channels=4, out_channels=8, kernel_size=3, stride=1, padding=1)
    N, Cin, H, W = 2, 4, 16, 16
    Cout, K = 8, 3
    stride, padding = 1, 1

    key = jax.random.PRNGKey(0)
    kx, kw, kb, ka = jax.random.split(key, 4)
    x = jax.random.normal(kx, (N, Cin, H, W), dtype=jnp.float32)
    weight = 0.1 * jax.random.normal(kw, (Cout, Cin, K, K), dtype=jnp.float32)
    bias = 0.1 * jax.random.normal(kb, (Cout,), dtype=jnp.float32)
    # nn.PReLU default init is 0.25 per channel; perturb to make it per-channel.
    alpha = 0.25 + 0.05 * jax.random.normal(ka, (Cout,), dtype=jnp.float32)

    # Fast path: bf16 matmul operands, f32 accumulation + epilogue.
    out_bf16 = conv_prelu(x, weight, bias, alpha, stride=stride, padding=padding,
                          compute_dtype=jnp.bfloat16)
    out_bf16 = jax.block_until_ready(out_bf16)
    ref_bf16 = _reference(x, weight, bias, alpha, stride=stride, padding=padding,
                          compute_dtype=jnp.bfloat16)
    assert out_bf16.shape == ref_bf16.shape == (N, Cout, H, W)
    assert jnp.max(jnp.abs(out_bf16 - ref_bf16)) < 5e-3

    # Exact-semantics path: f32 operands, matches the PyTorch module math.
    out_f32 = conv_prelu(x, weight, bias, alpha, stride=stride, padding=padding,
                         compute_dtype=jnp.float32)
    out_f32 = jax.block_until_ready(out_f32)
    ref_f32 = _reference(x, weight, bias, alpha, stride=stride, padding=padding,
                         compute_dtype=jnp.float32)
    assert out_f32.shape == (N, Cout, H, W)
    assert jnp.max(jnp.abs(out_f32 - ref_f32)) < 1e-3

    print("KERNEL_OK")
</pallas_src>

<mosaic_0001>
module attributes {stable_mosaic.version = 11 : i64} {
  func.func @_matmul_bias_prelu_kernel(%arg0: i32, %arg1: memref<256x36xbf16, #tpu.memory_space<vmem>>, %arg2: memref<36x128xbf16, #tpu.memory_space<vmem>>, %arg3: memref<1x128xf32, #tpu.memory_space<vmem>>, %arg4: memref<1x128xf32, #tpu.memory_space<vmem>>, %arg5: memref<256x128xf32, #tpu.memory_space<vmem>>) attributes {dimension_semantics = [#tpu.dimension_semantics<parallel>], iteration_bounds = array<i64: 2>, scalar_prefetch = 0 : i64, scratch_operands = 0 : i64, tpu.core_type = #tpu.core_type<tc>, window_params = [{transform_indices = @transform_0, window_bounds = array<i64: 256, 36>}, {pipeline_mode = #tpu.pipeline_mode<synchronous>, transform_indices = @transform_1, window_bounds = array<i64: 36, 128>}, {pipeline_mode = #tpu.pipeline_mode<synchronous>, transform_indices = @transform_2, window_bounds = array<i64: 1, 128>}, {pipeline_mode = #tpu.pipeline_mode<synchronous>, transform_indices = @transform_3, window_bounds = array<i64: 1, 128>}, {transform_indices = @transform_4, window_bounds = array<i64: 256, 128>}]} {
    %c0 = arith.constant 0 : index
    %c0_0 = arith.constant 0 : index
    %0 = vector.load %arg1[%c0, %c0_0] : memref<256x36xbf16, #tpu.memory_space<vmem>>, vector<256x36xbf16>
    %c0_1 = arith.constant 0 : index
    %c0_2 = arith.constant 0 : index
    %1 = vector.load %arg2[%c0_1, %c0_2] : memref<36x128xbf16, #tpu.memory_space<vmem>>, vector<36x128xbf16>
    %cst = arith.constant dense<0.000000e+00> : vector<256x128xf32>
    %2 = tpu.matmul %0, %1, %cst {dimension_numbers = #tpu.dot_dimension_numbers<[1], [0], [0], [1], [0, 0, 1, 1], [], []>} : vector<256x36xbf16>, vector<36x128xbf16>, vector<256x128xf32> -> vector<256x128xf32>
    %c0_3 = arith.constant 0 : index
    %c0_4 = arith.constant 0 : index
    %3 = vector.load %arg3[%c0_3, %c0_4] : memref<1x128xf32, #tpu.memory_space<vmem>>, vector<1x128xf32>
    %4 = vector.broadcast %3 : vector<1x128xf32> to vector<256x128xf32>
    %5 = arith.addf %2, %4 : vector<256x128xf32>
    %cst_5 = arith.constant 0.000000e+00 : f32
    %6 = vector.broadcast %cst_5 : f32 to vector<256x128xf32>
    %7 = arith.cmpf ogt, %5, %6 : vector<256x128xf32>
    %c0_6 = arith.constant 0 : index
    %c0_7 = arith.constant 0 : index
    %8 = vector.load %arg4[%c0_6, %c0_7] : memref<1x128xf32, #tpu.memory_space<vmem>>, vector<1x128xf32>
    %9 = vector.broadcast %8 : vector<1x128xf32> to vector<256x128xf32>
    %10 = arith.mulf %9, %5 : vector<256x128xf32>
    %11 = arith.select %7, %5, %10 : vector<256x128xi1>, vector<256x128xf32>
    %c0_8 = arith.constant 0 : index
    %c0_9 = arith.constant 0 : index
    %12 = vector.load %arg5[%c0_8, %c0_9] : memref<256x128xf32, #tpu.memory_space<vmem>>, vector<256x128xf32>
    tpu.vector_store %arg5[%c0_8, %c0_9], %11 {strides = array<i32>} : memref<256x128xf32, #tpu.memory_space<vmem>>, vector<256x128xf32>,
    return
  }
  func.func @transform_0(%arg0: i32) -> (i32, i32) {
    %c0_i32 = arith.constant 0 : i32
    %c0_i32_0 = arith.constant 0 : i32
    return %arg0, %c0_i32 : i32, i32
  }
  func.func @transform_1(%arg0: i32) -> (i32, i32) {
    %c0_i32 = arith.constant 0 : i32
    %c0_i32_0 = arith.constant 0 : i32
    %c0_i32_1 = arith.constant 0 : i32
    return %c0_i32, %c0_i32_0 : i32, i32
  }
  func.func @transform_2(%arg0: i32) -> (i32, i32) {
    %c0_i32 = arith.constant 0 : i32
    %c0_i32_0 = arith.constant 0 : i32
    %c0_i32_1 = arith.constant 0 : i32
    return %c0_i32, %c0_i32_0 : i32, i32
  }
  func.func @transform_3(%arg0: i32) -> (i32, i32) {
    %c0_i32 = arith.constant 0 : i32
    %c0_i32_0 = arith.constant 0 : i32
    %c0_i32_1 = arith.constant 0 : i32
    return %c0_i32, %c0_i32_0 : i32, i32
  }
  func.func @transform_4(%arg0: i32) -> (i32, i32) {
    %c0_i32 = arith.constant 0 : i32
    %c0_i32_0 = arith.constant 0 : i32
    return %arg0, %c0_i32 : i32, i32
  }
}

</mosaic_0001>

<llo_original>
// kernel: tpu_custom_call.1
$region0: #{tpu_custom_call.1}
  #allocation0 [shape = 'u32[]', space=smem, size = 0x4, offset = 0x4, fixed_abs, tag = 'smem constant byte address 0x4 - core index']
  #allocation1 [shape = 'u32[144,128]{1,0:T(1,128)}', space=vmem, size = 0x12000, scoped, tag = 'internal scratch']
  %s0 = inlined_call_operand.vmem [shape: bf16[512,36], index: 0, kind: input, shape index: {}]
  %s1 = inlined_call_operand.vmem [shape: bf16[36,128], index: 1, kind: input, shape index: {}]
  %s2 = inlined_call_operand.vmem [shape: f32[1,128], index: 2, kind: input, shape index: {}]
  %s3 = inlined_call_operand.vmem [shape: f32[1,128], index: 3, kind: input, shape index: {}]
  %s4 = inlined_call_operand.hbm [shape: f32[512,128], index: 4, kind: output, shape index: {}]
  %s5 = sld [smem:[#allocation0]]
  $region49: #{tpu_custom_call.1} parent=0
    _
  %s7 = ssub.s32 1, %s5
  %s8 = scalar_select 0, %s7, %s5
  $region1: #{tpu_custom_call.1} parent=0
    #allocation2 [shape = 'u8[262144]{0}', space=vmem, size = 0x40000, scoped, tag = 'output window, operand 0']
    #allocation3 [shape = 's32[2]{0}', space=sflag, size = 0x8, scoped, tag = 'scoped memory for tpu_custom_call.1']
    %9 = vsyncpa [#allocation3], 0
    %s10 = scalar_lea.sflag [#allocation3], 1
    %11 = vsyncpa %s10, 0
    loop: start=0, step=1, limit=4
    $region2: #{tpu_custom_call.1} parent=1 // loop_pre_header
      _
    $region3: #{tpu_custom_call.1} parent=1 // loop_header
      %s13 = sphi 0, %s17
      %p14 = scmp.ge.s32.totalorder %s13, 4
      %s23 = sphi 0, %s25
      %s26 = sphi 0, %s23
      %s27 = sphi 0, %s26
      %s43 = sphi 0, %s27
      %s47 = sphi 0, %s47
      %s49 = sphi 0, %s47
      %s50 = sphi 0, %s49
      %s64 = sphi 0, %s50
      %s68 = sphi 0, %s68
      %s70 = sphi 0, %s68
      %s71 = sphi 0, %s70
      %s85 = sphi 0, %s71
      %s89 = sphi 0, %s89
      %s91 = sphi 0, %s89
      %s92 = sphi 0, %s91
      %s106 = sphi 0, %s92
      %s112 = sphi 0, %s114
      %s115 = sphi 0, %s112
      %s116 = sphi 0, %s115
      %s132 = sphi 0, %s116
    $region4: #{tpu_custom_call.1} parent=1 // loop_header_branch
      %16 = sbr.rel (%p14) target = $region8
    $region5: #{tpu_custom_call.1} parent=1 // loop_body
      %s18 = ssub.s32 %s13, 1
      %s19 = ssub.s32 %s13, 2
      %s20 = sadd.s32 %s13, 1
      %s21 = ssub.s32 %s13, %s20
      %p22 = scmp.eq.s32.totalorder %s21, 0
      %s24 = sadd.s32 %s23, 1
      %s25 = scalar_select %p22, %s23, %s24
      %p28 = pneg %p22
      %p29 = scmp.eq.s32.totalorder %s13, 1
      %p30 = por %p28, %p29
      %p31 = scmp.ne.s32.totalorder %s23, %s26
      %p32 = scmp.eq.s32.totalorder %s13, 0
      %p33 = por %p31, %p32
      %p34 = scmp.ne.s32.totalorder %s23, %s26
      %p35 = scmp.eq.s32.totalorder %s18, 1
      %p36 = por %p34, %p35
      %p37 = scmp.ne.s32.totalorder %s26, %s27
      %p38 = scmp.eq.s32.totalorder %s18, 0
      %p39 = por %p37, %p38
      %p40 = scmp.ne.s32.totalorder %s26, %s27
      %p41 = scmp.eq.s32.totalorder %s19, 1
      %p42 = por %p40, %p41
      %p44 = scmp.ne.s32.totalorder %s27, %s43
      %p45 = scmp.eq.s32.totalorder %s19, 0
      %p46 = por %p44, %p45
      %s48 = sadd.s32 %s47, 1
      %p51 = scmp.eq.s32.totalorder %s13, 1
      %p52 = scmp.ne.s32.totalorder %s47, %s49
      %p53 = scmp.eq.s32.totalorder %s13, 0
      %p54 = por %p52, %p53
      %p55 = scmp.ne.s32.totalorder %s47, %s49
      %p56 = scmp.eq.s32.totalorder %s18, 1
      %p57 = por %p55, %p56
      %p58 = scmp.ne.s32.totalorder %s49, %s50
      %p59 = scmp.eq.s32.totalorder %s18, 0
      %p60 = por %p58, %p59
      %p61 = scmp.ne.s32.totalorder %s49, %s50
      %p62 = scmp.eq.s32.totalorder %s19, 1
      %p63 = por %p61, %p62
      %p65 = scmp.ne.s32.totalorder %s50, %s64
      %p66 = scmp.eq.s32.totalorder %s19, 0
      %p67 = por %p65, %p66
      %s69 = sadd.s32 %s68, 1
      %p72 = scmp.eq.s32.totalorder %s13, 1
      %p73 = scmp.ne.s32.totalorder %s68, %s70
      %p74 = scmp.eq.s32.totalorder %s13, 0
      %p75 = por %p73, %p74
      %p76 = scmp.ne.s32.totalorder %s68, %s70
      %p77 = scmp.eq.s32.totalorder %s18, 1
      %p78 = por %p76, %p77
      %p79 = scmp.ne.s32.totalorder %s70, %s71
      %p80 = scmp.eq.s32.totalorder %s18, 0
      %p81 = por %p79, %p80
      %p82 = scmp.ne.s32.totalorder %s70, %s71
      %p83 = scmp.eq.s32.totalorder %s19, 1
      %p84 = por %p82, %p83
      %p86 = scmp.ne.s32.totalorder %s71, %s85
      %p87 = scmp.eq.s32.totalorder %s19, 0
      %p88 = por %p86, %p87
      %s90 = sadd.s32 %s89, 1
      %p93 = scmp.eq.s32.totalorder %s13, 1
      %p94 = scmp.ne.s32.totalorder %s89, %s91
      %p95 = scmp.eq.s32.totalorder %s13, 0
      %p96 = por %p94, %p95
      %p97 = scmp.ne.s32.totalorder %s89, %s91
      %p98 = scmp.eq.s32.totalorder %s18, 1
      %p99 = por %p97, %p98
      %p100 = scmp.ne.s32.totalorder %s91, %s92
      %p101 = scmp.eq.s32.totalorder %s18, 0
      %p102 = por %p100, %p101
      %p103 = scmp.ne.s32.totalorder %s91, %s92
      %p104 = scmp.eq.s32.totalorder %s19, 1
      %p105 = por %p103, %p104
      %p107 = scmp.ne.s32.totalorder %s92, %s106
      %p108 = scmp.eq.s32.totalorder %s19, 0
      %p109 = por %p107, %p108
      %s110 = ssub.s32 %s13, %s20
      %p111 = scmp.eq.s32.totalorder %s110, 0
      %s113 = sadd.s32 %s112, 1
      %s114 = scalar_select %p111, %s112, %s113
      %p117 = pneg %p111
      %p118 = scmp.eq.s32.totalorder %s13, 1
      %p119 = por %p117, %p118
      %p120 = scmp.ne.s32.totalorder %s112, %s115
      %p121 = scmp.eq.s32.totalorder %s13, 0
      %p122 = por %p120, %p121
      %p123 = scmp.ne.s32.totalorder %s112, %s115
      %p124 = scmp.eq.s32.totalorder %s18, 1
      %p125 = por %p123, %p124
      %p126 = scmp.ne.s32.totalorder %s115, %s116
      %p127 = scmp.eq.s32.totalorder %s18, 0
      %p128 = por %p126, %p127
      %p129 = scmp.ne.s32.totalorder %s115, %s116
      %p130 = scmp.eq.s32.totalorder %s19, 1
      %p131 = por %p129, %p130
      %p133 = scmp.ne.s32.totalorder %s116, %s132
      %p134 = scmp.eq.s32.totalorder %s19, 0
      %p135 = por %p133, %p134
      %p136 = scmp.le.s32.totalorder 1, %s13
      %p137 = scmp.lt.s32.totalorder %s13, 3
      %p138 = pnand %p136, %p137
      %p139 = pneg %p138
      // Predicated region
      $region9: #{tpu_custom_call.1} parent=5 // pred_check
        _
      $region10: #{tpu_custom_call.1} parent=5 // pred_check_branch
        %141 = sbr.rel (%p138) target = $region12
      $region11: #{tpu_custom_call.1} parent=5 // pred_region
        %s142 = ssub.s32 %s13, 1
        // Predicated region
        $region13: #{tpu_custom_call.1} parent=11 // pred_check
          %p143 = pneg %p60
        $region14: #{tpu_custom_call.1} parent=11 // pred_check_branch
          %145 = sbr.rel (%p143) target = $region16
        $region15: #{tpu_custom_call.1} parent=11 // pred_region
          _
        $region16: #{tpu_custom_call.1} parent=11 // pred_fallthru
          _
        // Predicated region
        $region17: #{tpu_custom_call.1} parent=11 // pred_check
          %p146 = pneg %p81
        $region18: #{tpu_custom_call.1} parent=11 // pred_check_branch
          %148 = sbr.rel (%p146) target = $region20
        $region19: #{tpu_custom_call.1} parent=11 // pred_region
          _
        $region20: #{tpu_custom_call.1} parent=11 // pred_fallthru
          _
        // Predicated region
        $region21: #{tpu_custom_call.1} parent=11 // pred_check
          %p149 = pneg %p102
        $region22: #{tpu_custom_call.1} parent=11 // pred_check_branch
          %151 = sbr.rel (%p149) target = $region24
        $region23: #{tpu_custom_call.1} parent=11 // pred_region
          _
        $region24: #{tpu_custom_call.1} parent=11 // pred_fallthru
          _
      $region12: #{tpu_custom_call.1} parent=5 // pred_fallthru
        _
      %p152 = scmp.lt.s32.totalorder %s13, 2
      // Predicated region
      $region25: #{tpu_custom_call.1} parent=5 // pred_check
        %p153 = pneg %p152
      $region26: #{tpu_custom_call.1} parent=5 // pred_check_branch
        %155 = sbr.rel (%p153) target = $region28
      $region27: #{tpu_custom_call.1} parent=5 // pred_region
        // Predicated region
        $region29: #{tpu_custom_call.1} parent=27 // pred_check
          %p156 = pneg %p33
        $region30: #{tpu_custom_call.1} parent=27 // pred_check_branch
          %158 = sbr.rel (%p156) target = $region32
        $region31: #{tpu_custom_call.1} parent=27 // pred_region
          %s159 = smul.u32 32, %s13
          %p160 = scmp.lt.s32.totalorder %s159, 63
          %s161 = scalar_select %p160, %s159, 63
          %s162 = smul.addr %s161, 4
          %s163 = scalar_lea.vmem %s0, %s162
          %s164 = smul.u32 32, %s13
        $region32: #{tpu_custom_call.1} parent=27 // pred_fallthru
          _
      $region28: #{tpu_custom_call.1} parent=5 // pred_fallthru
        _
      %p165 = scmp.le.s32.totalorder 1, %s13
      %p166 = scmp.lt.s32.totalorder %s13, 3
      %p167 = pnand %p165, %p166
      %p168 = pneg %p167
      // Predicated region
      $region33: #{tpu_custom_call.1} parent=5 // pred_check
        _
      $region34: #{tpu_custom_call.1} parent=5 // pred_check_branch
        %170 = sbr.rel (%p167) target = $region36
      $region35: #{tpu_custom_call.1} parent=5 // pred_region
        %s171 = ssub.s32 %s13, 1
        %s172 = smul.u32 32, %s18
        %p173 = scmp.lt.s32.totalorder %s172, 63
        %s174 = scalar_select %p173, %s172, 63
        %s175 = smul.addr %s174, 4
        %s176 = scalar_lea.vmem %s0, %s175
        %p177 = pneg %p39
        %p178 = pneg %p36
        %p179 = pneg %p60
        %p180 = pneg %p57
        %p181 = pneg %p81
        %p182 = pneg %p78
        %p183 = pneg %p102
        %p184 = pneg %p99
        %p185 = pneg %p128
        %p186 = pneg %p125
        %s187 = sand.u32 %s115, 1
        %s188 = scalar_lea.sflag [#allocation3], %s187
        %s189 = sand.u32 %s115, 1
        %s190 = smul.addr %s189, 256
        %s191 = scalar_lea.vmem [#allocation2], %s190
        %s192 = smul.u32 32, %s18
        %p193 = scmp.lt.s32.totalorder %s192, 63
        %s194 = scalar_select %p193, %s192, 63
        %s195 = smul.addr %s194, 4
        %s196 = scalar_lea.vmem %s0, %s195
        %s197 = smul.u32 32, %s18
        %s198 = smul.u32 32, %s18
        %v200 = vld [vmem:[%s196] sm:$0xf]
        %v201 = vld [vmem:[%s196 + $0x4] sm:$0xf]
        %v202 = vld [vmem:[%s196 + $0x8] sm:$0xf]
        %v203 = vld [vmem:[%s196 + $0xc] sm:$0xf]
        %v204 = vld [vmem:[%s196 + $0x10] sm:$0xf]
        %v205 = vld [vmem:[%s196 + $0x14] sm:$0xf]
        %v206 = vld [vmem:[%s196 + $0x18] sm:$0xf]
        %v207 = vld [vmem:[%s196 + $0x1c] sm:$0xf]
        %v208 = vld [vmem:[%s196 + $0x20] sm:$0xf]
        %v209 = vld [vmem:[%s196 + $0x24] sm:$0xf]
        %v210 = vld [vmem:[%s196 + $0x28] sm:$0xf]
        %v211 = vld [vmem:[%s196 + $0x2c] sm:$0xf]
        %v212 = vld [vmem:[%s196 + $0x30] sm:$0xf]
        %v213 = vld [vmem:[%s196 + $0x34] sm:$0xf]
        %v214 = vld [vmem:[%s196 + $0x38] sm:$0xf]
        %v215 = vld [vmem:[%s196 + $0x3c] sm:$0xf]
        %v216 = vld [vmem:[%s196 + $0x40] sm:$0xf]
        %v217 = vld [vmem:[%s196 + $0x44] sm:$0xf]
        %v218 = vld [vmem:[%s196 + $0x48] sm:$0xf]
        %v219 = vld [vmem:[%s196 + $0x4c] sm:$0xf]
        %v220 = vld [vmem:[%s196 + $0x50] sm:$0xf]
        %v221 = vld [vmem:[%s196 + $0x54] sm:$0xf]
        %v222 = vld [vmem:[%s196 + $0x58] sm:$0xf]
        %v223 = vld [vmem:[%s196 + $0x5c] sm:$0xf]
        %v224 = vld [vmem:[%s196 + $0x60] sm:$0xf]
        %v225 = vld [vmem:[%s196 + $0x64] sm:$0xf]
        %v226 = vld [vmem:[%s196 + $0x68] sm:$0xf]
        %v227 = vld [vmem:[%s196 + $0x6c] sm:$0xf]
        %v228 = vld [vmem:[%s196 + $0x70] sm:$0xf]
        %v229 = vld [vmem:[%s196 + $0x74] sm:$0xf]
        %v230 = vld [vmem:[%s196 + $0x78] sm:$0xf]
        %v231 = vld [vmem:[%s196 + $0x7c] sm:$0xf]
        %v232 = vld [vmem:[%s1] sm:$0xf]
        %v233 = vld [vmem:[%s1 + $0x4] sm:$0xf]
        %v234 = vld [vmem:[%s1 + $0x8] sm:$0xf]
        %v235 = vld [vmem:[%s1 + $0xc] sm:$0xf]
        %v236 = vld [vmem:[%s1 + $0x10] sm:$0x3]
        %v237 = vld [vmem:[%s2] sm:$0x1]
        %v239 = vlaneseq
        %v240 = vshrl.u32 %v239, 7
        %v241 = vsub.s32 0, %v240
        %v242 = vrot.slane %v237, %v241
        %v276 = vunpack.c.l.b16 %v200
        %v277 = vunpack.c.l.b16 %v201
        %v278 = vunpack.c.l.b16 %v202
        %v279 = vunpack.c.l.b16 %v203
        %v280 = vunpack.c.l.b16 %v204
        %v281 = vunpack.c.l.b16 %v205
        %v282 = vunpack.c.l.b16 %v206
        %v283 = vunpack.c.l.b16 %v207
        %v284 = vunpack.c.l.b16 %v208
        %v285 = vunpack.c.l.b16 %v209
        %v286 = vunpack.c.l.b16 %v210
        %v287 = vunpack.c.l.b16 %v211
        %v288 = vunpack.c.l.b16 %v212
        %v289 = vunpack.c.l.b16 %v213
        %v290 = vunpack.c.l.b16 %v214
        %v291 = vunpack.c.l.b16 %v215
        %v292 = vunpack.c.l.b16 %v216
        %v293 = vunpack.c.l.b16 %v217
        %v294 = vunpack.c.l.b16 %v218
        %v295 = vunpack.c.l.b16 %v219
        %v296 = vunpack.c.l.b16 %v220
        %v297 = vunpack.c.l.b16 %v221
        %v298 = vunpack.c.l.b16 %v222
        %v299 = vunpack.c.l.b16 %v223
        %v300 = vunpack.c.l.b16 %v224
        %v301 = vunpack.c.l.b16 %v225
        %v302 = vunpack.c.l.b16 %v226
        %v303 = vunpack.c.l.b16 %v227
        %v304 = vunpack.c.l.b16 %v228
        %v305 = vunpack.c.l.b16 %v229
        %v306 = vunpack.c.l.b16 %v230
        %v307 = vunpack.c.l.b16 %v231
        %v308 = vpack.c.b16 %v277, %v276
        %v309 = vpack.c.b16 %v279, %v278
        %v310 = vpack.c.b16 %v281, %v280
        %v311 = vpack.c.b16 %v283, %v282
        %v312 = vpack.c.b16 %v285, %v284
        %v313 = vpack.c.b16 %v287, %v286
        %v314 = vpack.c.b16 %v289, %v288
        %v315 = vpack.c.b16 %v291, %v290
        %v316 = vpack.c.b16 %v293, %v292
        %v317 = vpack.c.b16 %v295, %v294
        %v318 = vpack.c.b16 %v297, %v296
        %v319 = vpack.c.b16 %v299, %v298
        %v320 = vpack.c.b16 %v301, %v300
        %v321 = vpack.c.b16 %v303, %v302
        %v322 = vpack.c.b16 %v305, %v304
        %v323 = vpack.c.b16 %v307, %v306
        %v329 = vunpack.c.l.b16 %v232
        %v330 = vunpack.c.l.b16 %v233
        %v331 = vunpack.c.l.b16 %v234
        %v332 = vunpack.c.l.b16 %v235
        %v333 = vunpack.c.l.b16 %v236
        %v334 = vpack.c.b16 %v330, %v329
        %v335 = vpack.c.b16 %v332, %v331
        %v336 = vpack.c.b16 %v333, %v333
        %vm339 = vcmask 293888
        %v341 = vsel %vm339, %v308, 0
        %v344 = vsel %vm339, %v309, 0
        %v347 = vsel %vm339, %v310, 0
        %v350 = vsel %vm339, %v311, 0
        %v353 = vsel %vm339, %v312, 0
        %v356 = vsel %vm339, %v313, 0
        %v359 = vsel %vm339, %v314, 0
        %v362 = vsel %vm339, %v315, 0
        %v365 = vsel %vm339, %v316, 0
        %v368 = vsel %vm339, %v317, 0
        %v371 = vsel %vm339, %v318, 0
        %v374 = vsel %vm339, %v319, 0
        %v377 = vsel %vm339, %v320, 0
        %v380 = vsel %vm339, %v321, 0
        %v383 = vsel %vm339, %v322, 0
        %v386 = vsel %vm339, %v323, 0
        %vm388 = vcmask 1041408
        %v390 = vsel %vm388, %v336, 0
        %392 = vmatprep.subr.bf16.mxu0 0
        %393 = vmatpush1.bf16.msra.mxu0 %v334
        %394 = vmatprep.subr.bf16.mxu0 0
        %395 = vmatpush1.bf16.msra.mxu0 %v335
        %396 = vmatprep.subr.bf16.mxu0 0
        %397 = vmatpush1.bf16.msra.mxu0 %v390
        %398 = vmatprep.subr.bf16.mxu0 0
        %399 = vmatpush1.bf16.msra.mxu0 0
        %400 = vmatprep.subr.bf16.mxu0 0
        %401 = vmatpush1.bf16.msra.mxu0 0
        %402 = vmatprep.subr.bf16.mxu0 0
        %403 = vmatpush1.bf16.msra.mxu0 0
        %404 = vmatprep.subr.bf16.mxu0 0
        %405 = vmatpush1.bf16.msra.mxu0 0
        %406 = vmatprep.subr.bf16.mxu0 0
        %407 = vmatpush1.bf16.msra.mxu0 0
        %408 = vmatprep.subr.bf16.mxu0 0
        %409 = vmatpush1.bf16.msra.mxu0 0
        %410 = vmatprep.subr.bf16.mxu0 0
        %411 = vmatpush1.bf16.msra.mxu0 0
        %412 = vmatprep.subr.bf16.mxu0 0
        %413 = vmatpush1.bf16.msra.mxu0 0
        %414 = vmatprep.subr.bf16.mxu0 0
        %415 = vmatpush1.bf16.msra.mxu0 0
        %416 = vmatprep.subr.bf16.mxu0 0
        %417 = vmatpush1.bf16.msra.mxu0 0
        %418 = vmatprep.subr.bf16.mxu0 0
        %419 = vmatpush1.bf16.msra.mxu0 0
        %420 = vmatprep.subr.bf16.mxu0 0
        %421 = vmatpush1.bf16.msra.mxu0 0
        %422 = vmatprep.subr.bf16.mxu0 0
        %423 = vmatpush1.bf16.msra.mxu0 0
        %424 = vmatprep.mubr.bf16.mxu0 0
        %425 = vmatmul.mubr.bf16.gmra.mrb[0].mxu0 %v341
        %v426 = vpop.f32.mrb[0].mxu0
        %v427 = vadd.f32 %v242, %v426
        %v428 = vpop.f32.mrb[0].mxu0
        %v429 = vpop.f32.mrb[0].mxu0
        %v430 = vadd.f32 %v242, %v429
        %v431 = vpop.f32.mrb[0].mxu0
        %432 = vmatprep.mubr.bf16.mxu0 0
        %433 = vmatmul.mubr.bf16.gmra.mrb[0].mxu0 %v344
        %v434 = vpop.f32.mrb[0].mxu0
        %v435 = vadd.f32 %v242, %v434
        %v436 = vpop.f32.mrb[0].mxu0
        %v437 = vpop.f32.mrb[0].mxu0
        %v438 = vadd.f32 %v242, %v437
        %v439 = vpop.f32.mrb[0].mxu0
        %440 = vmatprep.mubr.bf16.mxu0 0
        %441 = vmatmul.mubr.bf16.gmra.mrb[0].mxu0 %v347
        %v442 = vpop.f32.mrb[0].mxu0
        %v443 = vadd.f32 %v242, %v442
        %v444 = vpop.f32.mrb[0].mxu0
        %v445 = vpop.f32.mrb[0].mxu0
        %v446 = vadd.f32 %v242, %v445
        %v447 = vpop.f32.mrb[0].mxu0
        %448 = vmatprep.mubr.bf16.mxu0 0
        %449 = vmatmul.mubr.bf16.gmra.mrb[0].mxu0 %v350
        %v450 = vpop.f32.mrb[0].mxu0
        %v451 = vadd.f32 %v242, %v450
        %v452 = vpop.f32.mrb[0].mxu0
        %v453 = vpop.f32.mrb[0].mxu0
        %v454 = vadd.f32 %v242, %v453
        %v455 = vpop.f32.mrb[0].mxu0
        %456 = vmatprep.mubr.bf16.mxu0 0
        %457 = vmatmul.mubr.bf16.gmra.mrb[0].mxu0 %v353
        %v458 = vpop.f32.mrb[0].mxu0
        %v459 = vadd.f32 %v242, %v458
        %v460 = vpop.f32.mrb[0].mxu0
        %v461 = vpop.f32.mrb[0].mxu0
        %v462 = vadd.f32 %v242, %v461
        %v463 = vpop.f32.mrb[0].mxu0
        %464 = vmatprep.mubr.bf16.mxu0 0
        %465 = vmatmul.mubr.bf16.gmra.mrb[0].mxu0 %v356
        %v466 = vpop.f32.mrb[0].mxu0
        %v467 = vadd.f32 %v242, %v466
        %v468 = vpop.f32.mrb[0].mxu0
        %v469 = vpop.f32.mrb[0].mxu0
        %v470 = vadd.f32 %v242, %v469
        %v471 = vpop.f32.mrb[0].mxu0
        %472 = vmatprep.mubr.bf16.mxu0 0
        %473 = vmatmul.mubr.bf16.gmra.mrb[0].mxu0 %v359
        %v474 = vpop.f32.mrb[0].mxu0
        %v475 = vadd.f32 %v242, %v474
        %v476 = vpop.f32.mrb[0].mxu0
        %v477 = vpop.f32.mrb[0].mxu0
        %v478 = vadd.f32 %v242, %v477
        %v479 = vpop.f32.mrb[0].mxu0
        %480 = vmatprep.mubr.bf16.mxu0 0
        %481 = vmatmul.mubr.bf16.gmra.mrb[0].mxu0 %v362
        %v482 = vpop.f32.mrb[0].mxu0
        %v483 = vadd.f32 %v242, %v482
        %v484 = vpop.f32.mrb[0].mxu0
        %v485 = vpop.f32.mrb[0].mxu0
        %v486 = vadd.f32 %v242, %v485
        %v487 = vpop.f32.mrb[0].mxu0
        %488 = vmatprep.mubr.bf16.mxu0 0
        %489 = vmatmul.mubr.bf16.gmra.mrb[0].mxu0 %v365
        %v490 = vpop.f32.mrb[0].mxu0
        %v491 = vadd.f32 %v242, %v490
        %v492 = vpop.f32.mrb[0].mxu0
        %v493 = vpop.f32.mrb[0].mxu0
        %v494 = vadd.f32 %v242, %v493
        %v495 = vpop.f32.mrb[0].mxu0
        %496 = vmatprep.mubr.bf16.mxu0 0
        %497 = vmatmul.mubr.bf16.gmra.mrb[0].mxu0 %v368
        %v498 = vpop.f32.mrb[0].mxu0
        %v499 = vadd.f32 %v242, %v498
        %v500 = vpop.f32.mrb[0].mxu0
        %v501 = vpop.f32.mrb[0].mxu0
        %v502 = vadd.f32 %v242, %v501
        %v503 = vpop.f32.mrb[0].mxu0
        %504 = vmatprep.mubr.bf16.mxu0 0
        %505 = vmatmul.mubr.bf16.gmra.mrb[0].mxu0 %v371
        %v506 = vpop.f32.mrb[0].mxu0
        %v507 = vadd.f32 %v242, %v506
        %v508 = vpop.f32.mrb[0].mxu0
        %v509 = vpop.f32.mrb[0].mxu0
        %v510 = vadd.f32 %v242, %v509
        %v511 = vpop.f32.mrb[0].mxu0
        %512 = vmatprep.mubr.bf16.mxu0 0
        %513 = vmatmul.mubr.bf16.gmra.mrb[0].mxu0 %v374
        %v514 = vpop.f32.mrb[0].mxu0
        %v515 = vadd.f32 %v242, %v514
        %v516 = vpop.f32.mrb[0].mxu0
        %v517 = vpop.f32.mrb[0].mxu0
        %v518 = vadd.f32 %v242, %v517
        %v519 = vpop.f32.mrb[0].mxu0
        %520 = vmatprep.mubr.bf16.mxu0 0
        %521 = vmatmul.mubr.bf16.gmra.mrb[0].mxu0 %v377
        %v522 = vpop.f32.mrb[0].mxu0
        %v523 = vadd.f32 %v242, %v522
        %v524 = vpop.f32.mrb[0].mxu0
        %v525 = vpop.f32.mrb[0].mxu0
        %v526 = vadd.f32 %v242, %v525
        %v527 = vpop.f32.mrb[0].mxu0
        %528 = vmatprep.mubr.bf16.mxu0 0
        %529 = vmatmul.mubr.bf16.gmra.mrb[0].mxu0 %v380
        %v530 = vpop.f32.mrb[0].mxu0
        %v531 = vadd.f32 %v242, %v530
        %v532 = vpop.f32.mrb[0].mxu0
        %v533 = vpop.f32.mrb[0].mxu0
        %v534 = vadd.f32 %v242, %v533
        %v535 = vpop.f32.mrb[0].mxu0
        %536 = vmatprep.mubr.bf16.mxu0 0
        %537 = vmatmul.mubr.bf16.gmra.mrb[0].mxu0 %v383
        %v538 = vpop.f32.mrb[0].mxu0
        %v539 = vadd.f32 %v242, %v538
        %v540 = vpop.f32.mrb[0].mxu0
        %v541 = vpop.f32.mrb[0].mxu0
        %v542 = vadd.f32 %v242, %v541
        %v543 = vpop.f32.mrb[0].mxu0
        %544 = vmatprep.mubr.bf16.mxu0 0
        %545 = vmatmul.mubr.bf16.gmra.mrb[0].mxu0 %v386
        %v546 = vpop.f32.mrb[0].mxu0
        %v547 = vadd.f32 %v242, %v546
        %v548 = vpop.f32.mrb[0].mxu0
        %v549 = vpop.f32.mrb[0].mxu0
        %v550 = vadd.f32 %v242, %v549
        %v551 = vpop.f32.mrb[0].mxu0
        %552 = vdwg.mxu0
        %vm553 = vcmp.gt.f32.partialorder %v427, 0.0
        %vm554 = vcmp.gt.f32.partialorder %v430, 0.0
        %vm555 = vcmp.gt.f32.partialorder %v435, 0.0
        %vm556 = vcmp.gt.f32.partialorder %v438, 0.0
        %vm557 = vcmp.gt.f32.partialorder %v443, 0.0
        %vm558 = vcmp.gt.f32.partialorder %v446, 0.0
        %vm559 = vcmp.gt.f32.partialorder %v451, 0.0
        %vm560 = vcmp.gt.f32.partialorder %v454, 0.0
        %vm561 = vcmp.gt.f32.partialorder %v459, 0.0
        %vm562 = vcmp.gt.f32.partialorder %v462, 0.0
        %vm563 = vcmp.gt.f32.partialorder %v467, 0.0
        %vm564 = vcmp.gt.f32.partialorder %v470, 0.0
        %vm565 = vcmp.gt.f32.partialorder %v475, 0.0
        %vm566 = vcmp.gt.f32.partialorder %v478, 0.0
        %vm567 = vcmp.gt.f32.partialorder %v483, 0.0
        %vm568 = vcmp.gt.f32.partialorder %v486, 0.0
        %vm569 = vcmp.gt.f32.partialorder %v491, 0.0
        %vm570 = vcmp.gt.f32.partialorder %v494, 0.0
        %vm571 = vcmp.gt.f32.partialorder %v499, 0.0
        %vm572 = vcmp.gt.f32.partialorder %v502, 0.0
        %vm573 = vcmp.gt.f32.partialorder %v507, 0.0
        %vm574 = vcmp.gt.f32.partialorder %v510, 0.0
        %vm575 = vcmp.gt.f32.partialorder %v515, 0.0
        %vm576 = vcmp.gt.f32.partialorder %v518, 0.0
        %vm577 = vcmp.gt.f32.partialorder %v523, 0.0
        %vm578 = vcmp.gt.f32.partialorder %v526, 0.0
        %vm579 = vcmp.gt.f32.partialorder %v531, 0.0
        %vm580 = vcmp.gt.f32.partialorder %v534, 0.0
        %vm581 = vcmp.gt.f32.partialorder %v539, 0.0
        %vm582 = vcmp.gt.f32.partialorder %v542, 0.0
        %vm583 = vcmp.gt.f32.partialorder %v547, 0.0
        %vm584 = vcmp.gt.f32.partialorder %v550, 0.0
        %v585 = vld [vmem:[%s3] sm:$0x1]
        %v587 = vlaneseq
        %v588 = vshrl.u32 %v587, 7
        %v589 = vsub.s32 0, %v588
        %v590 = vrot.slane %v585, %v589
        %v592 = vmul.f32 %v590, %v427
        %v593 = vmul.f32 %v590, %v430
        %v594 = vmul.f32 %v590, %v435
        %v595 = vmul.f32 %v590, %v438
        %v596 = vmul.f32 %v590, %v443
        %v597 = vmul.f32 %v590, %v446
        %v598 = vmul.f32 %v590, %v451
        %v599 = vmul.f32 %v590, %v454
        %v600 = vmul.f32 %v590, %v459
        %v601 = vmul.f32 %v590, %v462
        %v602 = vmul.f32 %v590, %v467
        %v603 = vmul.f32 %v590, %v470
        %v604 = vmul.f32 %v590, %v475
        %v605 = vmul.f32 %v590, %v478
        %v606 = vmul.f32 %v590, %v483
        %v607 = vmul.f32 %v590, %v486
        %v608 = vmul.f32 %v590, %v491
        %v609 = vmul.f32 %v590, %v494
        %v610 = vmul.f32 %v590, %v499
        %v611 = vmul.f32 %v590, %v502
        %v612 = vmul.f32 %v590, %v507
        %v613 = vmul.f32 %v590, %v510
        %v614 = vmul.f32 %v590, %v515
        %v615 = vmul.f32 %v590, %v518
        %v616 = vmul.f32 %v590, %v523
        %v617 = vmul.f32 %v590, %v526
        %v618 = vmul.f32 %v590, %v531
        %v619 = vmul.f32 %v590, %v534
        %v620 = vmul.f32 %v590, %v539
        %v621 = vmul.f32 %v590, %v542
        %v622 = vmul.f32 %v590, %v547
        %v623 = vmul.f32 %v590, %v550
        %v624 = vsel %vm553, %v427, %v592
        %v625 = vsel %vm554, %v430, %v593
        %v626 = vsel %vm555, %v435, %v594
        %v627 = vsel %vm556, %v438, %v595
        %v628 = vsel %vm557, %v443, %v596
        %v629 = vsel %vm558, %v446, %v597
        %v630 = vsel %vm559, %v451, %v598
        %v631 = vsel %vm560, %v454, %v599
        %v632 = vsel %vm561, %v459, %v600
        %v633 = vsel %vm562, %v462, %v601
        %v634 = vsel %vm563, %v467, %v602
        %v635 = vsel %vm564, %v470, %v603
        %v636 = vsel %vm565, %v475, %v604
        %v637 = vsel %vm566, %v478, %v605
        %v638 = vsel %vm567, %v483, %v606
        %v639 = vsel %vm568, %v486, %v607
        %v640 = vsel %vm569, %v491, %v608
        %v641 = vsel %vm570, %v494, %v609
        %v642 = vsel %vm571, %v499, %v610
        %v643 = vsel %vm572, %v502, %v611
        %v644 = vsel %vm573, %v507, %v612
        %v645 = vsel %vm574, %v510, %v613
        %v646 = vsel %vm575, %v515, %v614
        %v647 = vsel %vm576, %v518, %v615
        %v648 = vsel %vm577, %v523, %v616
        %v649 = vsel %vm578, %v526, %v617
        %v650 = vsel %vm579, %v531, %v618
        %v651 = vsel %vm580, %v534, %v619
        %v652 = vsel %vm581, %v539, %v620
        %v653 = vsel %vm582, %v542, %v621
        %v654 = vsel %vm583, %v547, %v622
        %v655 = vsel %vm584, %v550, %v623
        %656 = vst [vmem:[%s191] sm:$0xff] %v624
        %657 = vst [vmem:[%s191 + $0x8] sm:$0xff] %v625
        %658 = vst [vmem:[%s191 + $0x10] sm:$0xff] %v626
        %659 = vst [vmem:[%s191 + $0x18] sm:$0xff] %v627
        %660 = vst [vmem:[%s191 + $0x20] sm:$0xff] %v628
        %661 = vst [vmem:[%s191 + $0x28] sm:$0xff] %v629
        %662 = vst [vmem:[%s191 + $0x30] sm:$0xff] %v630
        %663 = vst [vmem:[%s191 + $0x38] sm:$0xff] %v631
        %664 = vst [vmem:[%s191 + $0x40] sm:$0xff] %v632
        %665 = vst [vmem:[%s191 + $0x48] sm:$0xff] %v633
        %666 = vst [vmem:[%s191 + $0x50] sm:$0xff] %v634
        %667 = vst [vmem:[%s191 + $0x58] sm:$0xff] %v635
        %668 = vst [vmem:[%s191 + $0x60] sm:$0xff] %v636
        %669 = vst [vmem:[%s191 + $0x68] sm:$0xff] %v637
        %670 = vst [vmem:[%s191 + $0x70] sm:$0xff] %v638
        %671 = vst [vmem:[%s191 + $0x78] sm:$0xff] %v639
        %672 = vst [vmem:[%s191 + $0x80] sm:$0xff] %v640
        %673 = vst [vmem:[%s191 + $0x88] sm:$0xff] %v641
        %674 = vst [vmem:[%s191 + $0x90] sm:$0xff] %v642
        %675 = vst [vmem:[%s191 + $0x98] sm:$0xff] %v643
        %676 = vst [vmem:[%s191 + $0xa0] sm:$0xff] %v644
        %677 = vst [vmem:[%s191 + $0xa8] sm:$0xff] %v645
        %678 = vst [vmem:[%s191 + $0xb0] sm:$0xff] %v646
        %679 = vst [vmem:[%s191 + $0xb8] sm:$0xff] %v647
        %680 = vst [vmem:[%s191 + $0xc0] sm:$0xff] %v648
        %681 = vst [vmem:[%s191 + $0xc8] sm:$0xff] %v649
        %682 = vst [vmem:[%s191 + $0xd0] sm:$0xff] %v650
        %683 = vst [vmem:[%s191 + $0xd8] sm:$0xff] %v651
        %684 = vst [vmem:[%s191 + $0xe0] sm:$0xff] %v652
        %685 = vst [vmem:[%s191 + $0xe8] sm:$0xff] %v653
        %686 = vst [vmem:[%s191 + $0xf0] sm:$0xff] %v654
        %687 = vst [vmem:[%s191 + $0xf8] sm:$0xff] %v655
        %s688 = sand.u32 %s115, 1
        %s689 = scalar_lea.sflag [#allocation3], %s688
        %s690 = sand.u32 %s115, 1
        %s691 = smul.addr %s690, 256
        %s692 = scalar_lea.vmem [#allocation2], %s691
        // Predicated region
        $region37: #{tpu_custom_call.1} parent=35 // pred_check
          %p693 = pneg %p125
        $region38: #{tpu_custom_call.1} parent=35 // pred_check_branch
          %695 = sbr.rel (%p693) target = $region40
        $region39: #{tpu_custom_call.1} parent=35 // pred_region
          %s696 = smul.u32 32, %s18
          %s698 = ssub.s32 4096, 4096
          %699 = vsyncadd %s689, %s698
          %s700 = smul.addr %s696, 128
          %s701 = scalar_lea.hbm %s4, %s700
          %s702 = sshll.u32 %s692, 4
          %s703 = int_to_ptr.vmem [resolvable:$true] %s702
          %708 = dma.vmem_to_hbm [thread:$0]  %s703, 4096, %s701, %s689, 128, 128, 8
        $region40: #{tpu_custom_call.1} parent=35 // pred_fallthru
          _
      $region36: #{tpu_custom_call.1} parent=5 // pred_fallthru
        _
      %p709 = scmp.le.s32.totalorder 2, %s13
      // Predicated region
      $region41: #{tpu_custom_call.1} parent=5 // pred_check
        %p710 = pneg %p709
      $region42: #{tpu_custom_call.1} parent=5 // pred_check_branch
        %712 = sbr.rel (%p710) target = $region44
      $region43: #{tpu_custom_call.1} parent=5 // pred_region
        %s713 = ssub.s32 %s13, 2
        // Predicated region
        $region45: #{tpu_custom_call.1} parent=43 // pred_check
          %p714 = pneg %p131
        $region46: #{tpu_custom_call.1} parent=43 // pred_check_branch
          %716 = sbr.rel (%p714) target = $region48
        $region47: #{tpu_custom_call.1} parent=43 // pred_region
          %s717 = sand.u32 %s116, 1
          %s718 = scalar_lea.sflag [#allocation3], %s717
          %s719 = sand.u32 %s116, 1
          %s720 = smul.addr %s719, 256
          %s721 = scalar_lea.vmem [#allocation2], %s720
          %722 = dma.done %s718, 4096
        $region48: #{tpu_custom_call.1} parent=43 // pred_fallthru
          _
      $region44: #{tpu_custom_call.1} parent=5 // pred_fallthru
        _
    $region6: #{tpu_custom_call.1} parent=1 // loop_footer
      %s17 = sadd.s32 1, %s13
    $region7: #{tpu_custom_call.1} parent=1 // loop_footer_branch
      %12 = sbr.rel target = $region3
    $region8: #{tpu_custom_call.1} parent=1 // loop_exit
      _
    %723 = vsyncpa [#allocation3], 1
    %s724 = scalar_lea.sflag [#allocation3], 1
    %725 = vsyncpa %s724, 1

</llo_original>
